<compile_context>
chip_gen: v5e
topology: v5e:2x2
jax: 0.10.0
libtpu: 0.0.40
codegen_flags: <defaults>
</compile_context>

<pallas_src>
import functools

import jax
import jax.numpy as jnp
from jax.experimental import pallas as pl
from jax.experimental.pallas import tpu as pltpu


def _round_up(x, m):
    return ((x + m - 1) // m) * m


def _gated_add_kernel(x1_ref, x2_ref, w1_ref, b1_ref, w2_ref, b2_ref, o_ref,
                      *, dp, dout):
    # Two MXU calls, f32 accumulation.  Chunk layout of each z: [t | g].
    z1 = jnp.dot(x1_ref[...], w1_ref[...],
                 preferred_element_type=jnp.float32) + b1_ref[...]
    z2 = jnp.dot(x2_ref[...], w2_ref[...],
                 preferred_element_type=jnp.float32) + b2_ref[...]

    # 128-lane-aligned chunk slices (dp is a multiple of 128).
    t1, g1 = z1[:, :dp], z1[:, dp:]
    t2, g2 = z2[:, :dp], z2[:, dp:]

    # f32 epilogue on VPU/EUP; downcast only at the final store.  The store
    # keeps only the first `dout` lanes -> unpadded (N, Dout) output in HBM.
    out = t1 * jax.nn.sigmoid(g1) + t2 * jax.nn.sigmoid(g2)
    o_ref[...] = out[:, :dout].astype(o_ref.dtype)


def _pack_params(params, x_dtype):
    """Pack the four Linear layers into two weights / two biases.

    Returns (W1, b1, W2, b2, dp) with W* of shape (Din, 2*Dp) in x_dtype and
    b* of shape (1, 2*Dp) in f32.  Column layout of each packed pair: [t | g],
    each chunk padded to Dp = round_up(Dout, 128) lanes.
    """
    wt1, wg1 = params["wt1"], params["wg1"]
    wt2, wg2 = params["wt2"], params["wg2"]
    bt1, bg1 = params["bt1"], params["bg1"]
    bt2, bg2 = params["bt2"], params["bg2"]

    _, dout = wt1.shape
    dp = _round_up(max(dout, 1), 128)

    def pad_cols(a):
        return jnp.pad(a, ((0, 0), (0, dp - dout)))

    w1 = jnp.concatenate([pad_cols(wt1), pad_cols(wg1)], axis=1).astype(x_dtype)
    w2 = jnp.concatenate([pad_cols(wt2), pad_cols(wg2)], axis=1).astype(x_dtype)
    b1 = jnp.concatenate([pad_cols(bt1), pad_cols(bg1)], axis=1).astype(jnp.float32)
    b2 = jnp.concatenate([pad_cols(bt2), pad_cols(bg2)], axis=1).astype(jnp.float32)
    return w1, b1, w2, b2, dp


def _choose_tile_m(n, din, dout, dp, itemsize):
    """Row-tile size: big tiles for streaming, >=2 grid steps for v7x dual TC,
    capped against a conservative VMEM budget (fits the 32 MiB scoped default
    on v5e/v6e/v7x)."""
    budget = 24 * 1024 * 1024
    # Resident (double-buffered) weights + biases.
    weight_bytes = 2 * (2 * din * 2 * dp * itemsize) + 2 * (2 * 2 * dp * 4)
    # Per-row cost: double-buffered x1 + x2 blocks, output block, f32 temps.
    per_row = 2 * 2 * din * itemsize + 2 * dout * itemsize + 3 * dp * 4
    vmem_cap = max(8, ((budget - weight_bytes) // max(per_row, 1)) // 8 * 8)

    if n < 256:
        tile = _round_up(max(n, 8), 8)          # single grid step is fine
    else:
        # At least 2 steps so both v7x TensorCores get work; up to 1024 rows
        # per step to amortize the ~0.35 us per-grid-step overhead.
        tile = min(1024, _round_up(pl.cdiv(n, 2), 8))
    return max(8, min(tile, vmem_cap))


def additive_gated_layer(x1, x2, params, *, tile_m=None):
    """params: dict with wt1, bt1, wg1, bg1, wt2, bt2, wg2, bg2.
    Weights are (input_dim, output_dim); biases are (1, output_dim)."""
    n, din = x1.shape
    assert x2.shape == (n, din)
    dout = params["wt1"].shape[1]

    w1, b1, w2, b2, dp = _pack_params(params, x1.dtype)
    itemsize = jnp.dtype(x1.dtype).itemsize

    if tile_m is None:
        tile_m = _choose_tile_m(n, din, dout, dp, itemsize)
    tile_m = max(8, _round_up(tile_m, 8))

    grid_m = pl.cdiv(n, tile_m)
    n_pad = grid_m * tile_m
    if n_pad != n:
        pad = ((0, n_pad - n), (0, 0))
        x1 = jnp.pad(x1, pad)
        x2 = jnp.pad(x2, pad)

    x_spec = pl.BlockSpec((tile_m, din), lambda i: (i, 0))
    w_spec = pl.BlockSpec((din, 2 * dp), lambda i: (0, 0))
    b_spec = pl.BlockSpec((1, 2 * dp), lambda i: (0, 0))
    o_spec = pl.BlockSpec((tile_m, dout), lambda i: (i, 0))

    # Real work only (no block-diag zeros, no padded lanes).
    flops = 8 * n * din * dout + 3 * n * dout
    transcendentals = 2 * n * dout
    bytes_accessed = int(
        2 * n * din * itemsize                              # x1 + x2
        + 2 * w1.size * jnp.dtype(w1.dtype).itemsize        # W1 + W2
        + 2 * b1.size * 4                                   # biases
        + n * dout * itemsize)                              # output

    out = pl.pallas_call(
        functools.partial(_gated_add_kernel, dp=dp, dout=dout),
        out_shape=jax.ShapeDtypeStruct((n_pad, dout), x1.dtype),
        grid_spec=pltpu.PrefetchScalarGridSpec(
            num_scalar_prefetch=0,
            grid=(grid_m,),
            in_specs=[x_spec, x_spec, w_spec, b_spec, w_spec, b_spec],
            out_specs=o_spec,
        ),
        compiler_params=pltpu.CompilerParams(
            dimension_semantics=("parallel",)),
        cost_estimate=pl.CostEstimate(
            flops=flops,
            transcendentals=transcendentals,
            bytes_accessed=bytes_accessed),
    )(x1, x2, w1, b1, w2, b2)

    return out if n_pad == n else out[:n]


def init_params(key, input_dim, output_dim):
    """Deterministic init mimicking nn.Linear default (uniform +-1/sqrt(fan_in))."""
    ks = jax.random.split(key, 8)
    bound = 1.0 / jnp.sqrt(input_dim)

    def lin(kw, kb):
        w = jax.random.uniform(kw, (input_dim, output_dim), jnp.float32,
                               minval=-bound, maxval=bound)
        b = jax.random.uniform(kb, (1, output_dim), jnp.float32,
                               minval=-bound, maxval=bound)
        return w, b

    wt1, bt1 = lin(ks[0], ks[1])
    wg1, bg1 = lin(ks[2], ks[3])
    wt2, bt2 = lin(ks[4], ks[5])
    wg2, bg2 = lin(ks[6], ks[7])
    return dict(wt1=wt1, bt1=bt1, wg1=wg1, bg1=bg1,
                wt2=wt2, bt2=bt2, wg2=wg2, bg2=bg2)


def reference(x1, x2, p):
    t1 = x1 @ p["wt1"] + p["bt1"]
    g1 = jax.nn.sigmoid(x1 @ p["wg1"] + p["bg1"])
    t2 = x2 @ p["wt2"] + p["bt2"]
    g2 = jax.nn.sigmoid(x2 @ p["wg2"] + p["bg2"])
    return t1 * g1 + t2 * g2


if __name__ == "__main__":
    key = jax.random.PRNGKey(0)
    k1, k2, kp, k3, k4, kq = jax.random.split(key, 6)

    # Shapes consistent with the Cate_CNN gate: x1/x2 are per-graph readouts of
    # width hidden_dim_hetero // 4; output width is n_classes.
    batch, input_dim, output_dim = 128, 32, 32
    x1 = jax.random.normal(k1, (batch, input_dim), jnp.float32)
    x2 = jax.random.normal(k2, (batch, input_dim), jnp.float32)
    params = init_params(kp, input_dim, output_dim)

    out = jax.block_until_ready(additive_gated_layer(x1, x2, params))
    ref = reference(x1, x2, params)
    assert out.shape == (batch, output_dim)
    assert jnp.allclose(out, ref, atol=1e-5, rtol=1e-5)

    # Odd batch + non-aligned output width exercises the pad+slice / masked
    # store paths.
    b2_, in2, out2 = 37, 16, 10
    y1 = jax.random.normal(k3, (b2_, in2), jnp.float32)
    y2 = jax.random.normal(k4, (b2_, in2), jnp.float32)
    params2 = init_params(kq, in2, out2)
    o2 = jax.block_until_ready(additive_gated_layer(y1, y2, params2))
    r2 = reference(y1, y2, params2)
    assert o2.shape == (b2_, out2)
    assert jnp.allclose(o2, r2, atol=1e-5, rtol=1e-5)

    print("KERNEL_OK")
</pallas_src>

<mosaic_0001>
module attributes {stable_mosaic.version = 11 : i64} {
  func.func @_gated_add_kernel(%arg0: i32, %arg1: memref<128x32xf32, #tpu.memory_space<vmem>>, %arg2: memref<128x32xf32, #tpu.memory_space<vmem>>, %arg3: memref<32x256xf32, #tpu.memory_space<vmem>>, %arg4: memref<1x256xf32, #tpu.memory_space<vmem>>, %arg5: memref<32x256xf32, #tpu.memory_space<vmem>>, %arg6: memref<1x256xf32, #tpu.memory_space<vmem>>, %arg7: memref<128x32xf32, #tpu.memory_space<vmem>>) attributes {dimension_semantics = [#tpu.dimension_semantics<parallel>], iteration_bounds = array<i64: 1>, scalar_prefetch = 0 : i64, scratch_operands = 0 : i64, tpu.core_type = #tpu.core_type<tc>, window_params = [{transform_indices = @transform_0, window_bounds = array<i64: 128, 32>}, {transform_indices = @transform_1, window_bounds = array<i64: 128, 32>}, {pipeline_mode = #tpu.pipeline_mode<synchronous>, transform_indices = @transform_2, window_bounds = array<i64: 32, 256>}, {pipeline_mode = #tpu.pipeline_mode<synchronous>, transform_indices = @transform_3, window_bounds = array<i64: 1, 256>}, {pipeline_mode = #tpu.pipeline_mode<synchronous>, transform_indices = @transform_4, window_bounds = array<i64: 32, 256>}, {pipeline_mode = #tpu.pipeline_mode<synchronous>, transform_indices = @transform_5, window_bounds = array<i64: 1, 256>}, {transform_indices = @transform_6, window_bounds = array<i64: 128, 32>}]} {
    %c0 = arith.constant 0 : index
    %c0_0 = arith.constant 0 : index
    %0 = vector.load %arg1[%c0, %c0_0] : memref<128x32xf32, #tpu.memory_space<vmem>>, vector<128x32xf32>
    %c0_1 = arith.constant 0 : index
    %c0_2 = arith.constant 0 : index
    %1 = vector.load %arg3[%c0_1, %c0_2] : memref<32x256xf32, #tpu.memory_space<vmem>>, vector<32x256xf32>
    %cst = arith.constant dense<0.000000e+00> : vector<128x256xf32>
    %2 = tpu.matmul %0, %1, %cst {dimension_numbers = #tpu.dot_dimension_numbers<[1], [0], [0], [1], [0, 0, 1, 1], [], []>} : vector<128x32xf32>, vector<32x256xf32>, vector<128x256xf32> -> vector<128x256xf32>
    %c0_3 = arith.constant 0 : index
    %c0_4 = arith.constant 0 : index
    %3 = vector.load %arg4[%c0_3, %c0_4] : memref<1x256xf32, #tpu.memory_space<vmem>>, vector<1x256xf32>
    %4 = vector.broadcast %3 : vector<1x256xf32> to vector<128x256xf32>
    %5 = arith.addf %2, %4 : vector<128x256xf32>
    %c0_5 = arith.constant 0 : index
    %c0_6 = arith.constant 0 : index
    %6 = vector.load %arg2[%c0_5, %c0_6] : memref<128x32xf32, #tpu.memory_space<vmem>>, vector<128x32xf32>
    %c0_7 = arith.constant 0 : index
    %c0_8 = arith.constant 0 : index
    %7 = vector.load %arg5[%c0_7, %c0_8] : memref<32x256xf32, #tpu.memory_space<vmem>>, vector<32x256xf32>
    %cst_9 = arith.constant dense<0.000000e+00> : vector<128x256xf32>
    %8 = tpu.matmul %6, %7, %cst_9 {dimension_numbers = #tpu.dot_dimension_numbers<[1], [0], [0], [1], [0, 0, 1, 1], [], []>} : vector<128x32xf32>, vector<32x256xf32>, vector<128x256xf32> -> vector<128x256xf32>
    %c0_10 = arith.constant 0 : index
    %c0_11 = arith.constant 0 : index
    %9 = vector.load %arg6[%c0_10, %c0_11] : memref<1x256xf32, #tpu.memory_space<vmem>>, vector<1x256xf32>
    %10 = vector.broadcast %9 : vector<1x256xf32> to vector<128x256xf32>
    %11 = arith.addf %8, %10 : vector<128x256xf32>
    %12 = vector.extract_strided_slice %5 {offsets = [0, 0], sizes = [128, 128], strides = [1, 1]} : vector<128x256xf32> to vector<128x128xf32>
    %13 = vector.extract_strided_slice %5 {offsets = [0, 128], sizes = [128, 128], strides = [1, 1]} : vector<128x256xf32> to vector<128x128xf32>
    %14 = vector.extract_strided_slice %11 {offsets = [0, 0], sizes = [128, 128], strides = [1, 1]} : vector<128x256xf32> to vector<128x128xf32>
    %15 = vector.extract_strided_slice %11 {offsets = [0, 128], sizes = [128, 128], strides = [1, 1]} : vector<128x256xf32> to vector<128x128xf32>
    %16 = arith.negf %13 : vector<128x128xf32>
    %17 = math.exp %16 : vector<128x128xf32>
    %cst_12 = arith.constant 1.000000e+00 : f32
    %18 = vector.broadcast %cst_12 : f32 to vector<128x128xf32>
    %19 = arith.addf %18, %17 : vector<128x128xf32>
    %20 = arith.divf %18, %19 : vector<128x128xf32>
    %21 = arith.mulf %12, %20 : vector<128x128xf32>
    %22 = arith.negf %15 : vector<128x128xf32>
    %23 = math.exp %22 : vector<128x128xf32>
    %cst_13 = arith.constant 1.000000e+00 : f32
    %24 = vector.broadcast %cst_13 : f32 to vector<128x128xf32>
    %25 = arith.addf %24, %23 : vector<128x128xf32>
    %26 = arith.divf %24, %25 : vector<128x128xf32>
    %27 = arith.mulf %14, %26 : vector<128x128xf32>
    %28 = arith.addf %21, %27 : vector<128x128xf32>
    %29 = vector.extract_strided_slice %28 {offsets = [0, 0], sizes = [128, 32], strides = [1, 1]} : vector<128x128xf32> to vector<128x32xf32>
    %c0_14 = arith.constant 0 : index
    %c0_15 = arith.constant 0 : index
    %30 = vector.load %arg7[%c0_14, %c0_15] : memref<128x32xf32, #tpu.memory_space<vmem>>, vector<128x32xf32>
    tpu.vector_store %arg7[%c0_14, %c0_15], %29 {strides = array<i32>} : memref<128x32xf32, #tpu.memory_space<vmem>>, vector<128x32xf32>,
    return
  }
  func.func @transform_0(%arg0: i32) -> (i32, i32) {
    %c0_i32 = arith.constant 0 : i32
    %c0_i32_0 = arith.constant 0 : i32
    return %arg0, %c0_i32 : i32, i32
  }
  func.func @transform_1(%arg0: i32) -> (i32, i32) {
    %c0_i32 = arith.constant 0 : i32
    %c0_i32_0 = arith.constant 0 : i32
    return %arg0, %c0_i32 : i32, i32
  }
  func.func @transform_2(%arg0: i32) -> (i32, i32) {
    %c0_i32 = arith.constant 0 : i32
    %c0_i32_0 = arith.constant 0 : i32
    %c0_i32_1 = arith.constant 0 : i32
    return %c0_i32, %c0_i32_0 : i32, i32
  }
  func.func @transform_3(%arg0: i32) -> (i32, i32) {
    %c0_i32 = arith.constant 0 : i32
    %c0_i32_0 = arith.constant 0 : i32
    %c0_i32_1 = arith.constant 0 : i32
    return %c0_i32, %c0_i32_0 : i32, i32
  }
  func.func @transform_4(%arg0: i32) -> (i32, i32) {
    %c0_i32 = arith.constant 0 : i32
    %c0_i32_0 = arith.constant 0 : i32
    %c0_i32_1 = arith.constant 0 : i32
    return %c0_i32, %c0_i32_0 : i32, i32
  }
  func.func @transform_5(%arg0: i32) -> (i32, i32) {
    %c0_i32 = arith.constant 0 : i32
    %c0_i32_0 = arith.constant 0 : i32
    %c0_i32_1 = arith.constant 0 : i32
    return %c0_i32, %c0_i32_0 : i32, i32
  }
  func.func @transform_6(%arg0: i32) -> (i32, i32) {
    %c0_i32 = arith.constant 0 : i32
    %c0_i32_0 = arith.constant 0 : i32
    return %arg0, %c0_i32 : i32, i32
  }
}

</mosaic_0001>

<llo_original>
// kernel: tpu_custom_call.1
$region0: #{tpu_custom_call.1}
  #allocation0 [shape = 'u32[]', space=smem, size = 0x4, offset = 0x4, fixed_abs, tag = 'smem constant byte address 0x4 - core index']
  #allocation1 [shape = 'u32[72,128]{1,0:T(1,128)}', space=vmem, size = 0x9000, scoped, tag = 'internal scratch']
  %s0 = inlined_call_operand.vmem [shape: f32[128,32], index: 0, kind: input, shape index: {}]
  %s1 = inlined_call_operand.vmem [shape: f32[128,32], index: 1, kind: input, shape index: {}]
  %s2 = inlined_call_operand.vmem [shape: f32[32,256], index: 2, kind: input, shape index: {}]
  %s3 = inlined_call_operand.vmem [shape: f32[1,256], index: 3, kind: input, shape index: {}]
  %s4 = inlined_call_operand.vmem [shape: f32[32,256], index: 4, kind: input, shape index: {}]
  %s5 = inlined_call_operand.vmem [shape: f32[1,256], index: 5, kind: input, shape index: {}]
  %s6 = inlined_call_operand.vmem [shape: f32[128,32], index: 6, kind: output, shape index: {}]
  %s7 = sld [smem:[#allocation0]]
  $region34: #{tpu_custom_call.1} parent=0
    _
  %s9 = ssub.s32 1, %s7
  %s10 = scalar_select 0, %s9, %s7
  // Predicated region
  $region2: #{tpu_custom_call.1} parent=0 // pred_check
    _
  $region3: #{tpu_custom_call.1} parent=0 // pred_check_branch
    %12 = sbr.rel (0) target = $region5
  $region4: #{tpu_custom_call.1} parent=0 // pred_region
    _
  $region5: #{tpu_custom_call.1} parent=0 // pred_fallthru
    _
  // Predicated region
  $region6: #{tpu_custom_call.1} parent=0 // pred_check
    _
  $region7: #{tpu_custom_call.1} parent=0 // pred_check_branch
    %14 = sbr.rel (0) target = $region9
  $region8: #{tpu_custom_call.1} parent=0 // pred_region
    _
  $region9: #{tpu_custom_call.1} parent=0 // pred_fallthru
    _
  // Predicated region
  $region10: #{tpu_custom_call.1} parent=0 // pred_check
    _
  $region11: #{tpu_custom_call.1} parent=0 // pred_check_branch
    %16 = sbr.rel (0) target = $region13
  $region12: #{tpu_custom_call.1} parent=0 // pred_region
    _
  $region13: #{tpu_custom_call.1} parent=0 // pred_fallthru
    _
  // Predicated region
  $region14: #{tpu_custom_call.1} parent=0 // pred_check
    _
  $region15: #{tpu_custom_call.1} parent=0 // pred_check_branch
    %18 = sbr.rel (0) target = $region17
  $region16: #{tpu_custom_call.1} parent=0 // pred_region
    _
  $region17: #{tpu_custom_call.1} parent=0 // pred_fallthru
    _
  // Predicated region
  $region18: #{tpu_custom_call.1} parent=0 // pred_check
    _
  $region19: #{tpu_custom_call.1} parent=0 // pred_check_branch
    %20 = sbr.rel (0) target = $region21
  $region20: #{tpu_custom_call.1} parent=0 // pred_region
    _
  $region21: #{tpu_custom_call.1} parent=0 // pred_fallthru
    _
  // Predicated region
  $region22: #{tpu_custom_call.1} parent=0 // pred_check
    _
  $region23: #{tpu_custom_call.1} parent=0 // pred_check_branch
    %22 = sbr.rel (0) target = $region25
  $region24: #{tpu_custom_call.1} parent=0 // pred_region
    _
  $region25: #{tpu_custom_call.1} parent=0 // pred_fallthru
    _
  %v23 = vld [vmem:[%s0] sm:$0xff]
  %v24 = vld [vmem:[%s0 + $0x8] sm:$0xff]
  %v25 = vld [vmem:[%s0 + $0x10] sm:$0xff]
  %v26 = vld [vmem:[%s0 + $0x18] sm:$0xff]
  %v27 = vld [vmem:[%s0 + $0x20] sm:$0xff]
  %v28 = vld [vmem:[%s0 + $0x28] sm:$0xff]
  %v29 = vld [vmem:[%s0 + $0x30] sm:$0xff]
  %v30 = vld [vmem:[%s0 + $0x38] sm:$0xff]
  %v31 = vld [vmem:[%s0 + $0x40] sm:$0xff]
  %v32 = vld [vmem:[%s0 + $0x48] sm:$0xff]
  %v33 = vld [vmem:[%s0 + $0x50] sm:$0xff]
  %v34 = vld [vmem:[%s0 + $0x58] sm:$0xff]
  %v35 = vld [vmem:[%s0 + $0x60] sm:$0xff]
  %v36 = vld [vmem:[%s0 + $0x68] sm:$0xff]
  %v37 = vld [vmem:[%s0 + $0x70] sm:$0xff]
  %v38 = vld [vmem:[%s0 + $0x78] sm:$0xff]
  %v39 = vld [vmem:[%s2] sm:$0xff]
  %v40 = vld [vmem:[%s2 + $0x8] sm:$0xff]
  %v41 = vld [vmem:[%s2 + $0x10] sm:$0xff]
  %v42 = vld [vmem:[%s2 + $0x18] sm:$0xff]
  %v43 = vld [vmem:[%s2 + $0x20] sm:$0xff]
  %v44 = vld [vmem:[%s2 + $0x28] sm:$0xff]
  %v45 = vld [vmem:[%s2 + $0x30] sm:$0xff]
  %v46 = vld [vmem:[%s2 + $0x38] sm:$0xff]
  %v47 = vld [vmem:[%s3] sm:$0x3]
  %v49 = vperm.slane %v47, 0
  %v50 = vperm.slane %v47, 1
  %vm53 = vcmask 261120
  %v55 = vsel %vm53, %v23, 0
  %v58 = vsel %vm53, %v24, 0
  %v61 = vsel %vm53, %v25, 0
  %v64 = vsel %vm53, %v26, 0
  %v67 = vsel %vm53, %v27, 0
  %v70 = vsel %vm53, %v28, 0
  %v73 = vsel %vm53, %v29, 0
  %v76 = vsel %vm53, %v30, 0
  %v79 = vsel %vm53, %v31, 0
  %v82 = vsel %vm53, %v32, 0
  %v85 = vsel %vm53, %v33, 0
  %v88 = vsel %vm53, %v34, 0
  %v91 = vsel %vm53, %v35, 0
  %v94 = vsel %vm53, %v36, 0
  %v97 = vsel %vm53, %v37, 0
  %v100 = vsel %vm53, %v38, 0
  %102 = vmatpush.msra.mxu0 0.0
  %103 = vmatpush.msra.mxu0 0.0
  %104 = vmatpush.msra.mxu0 0.0
  %105 = vmatpush.msra.mxu0 0.0
  %106 = vmatpush.msra.mxu0 0.0
  %107 = vmatpush.msra.mxu0 0.0
  %108 = vmatpush.msra.mxu0 0.0
  %109 = vmatpush.msra.mxu0 0.0
  %110 = vmatpush.msra.mxu0 0.0
  %111 = vmatpush.msra.mxu0 0.0
  %112 = vmatpush.msra.mxu0 0.0
  %113 = vmatpush.msra.mxu0 0.0
  %114 = vmatpush.msra.mxu0 %v45
  %115 = vmatpush.msra.mxu0 %v43
  %116 = vmatpush.msra.mxu0 %v41
  %117 = vmatpush.msra.mxu0 %v39
  %118 = vmatmul.f32.gmra.mxu0 %v55
  %v119 = vpop.f32.mrf.mxu0
  %v120 = vadd.f32 %v49, %v119
  %121 = vmatmul.f32.gmra.mxu0 %v58
  %v122 = vpop.f32.mrf.mxu0
  %v123 = vadd.f32 %v49, %v122
  %124 = vmatmul.f32.gmra.mxu0 %v61
  %v125 = vpop.f32.mrf.mxu0
  %v126 = vadd.f32 %v49, %v125
  %127 = vmatmul.f32.gmra.mxu0 %v64
  %v128 = vpop.f32.mrf.mxu0
  %v129 = vadd.f32 %v49, %v128
  %130 = vmatmul.f32.gmra.mxu0 %v67
  %v131 = vpop.f32.mrf.mxu0
  %v132 = vadd.f32 %v49, %v131
  %133 = vmatmul.f32.gmra.mxu0 %v70
  %v134 = vpop.f32.mrf.mxu0
  %v135 = vadd.f32 %v49, %v134
  %136 = vmatmul.f32.gmra.mxu0 %v73
  %v137 = vpop.f32.mrf.mxu0
  %v138 = vadd.f32 %v49, %v137
  %139 = vmatmul.f32.gmra.mxu0 %v76
  %v140 = vpop.f32.mrf.mxu0
  %v141 = vadd.f32 %v49, %v140
  %142 = vmatmul.f32.gmra.mxu0 %v79
  %v143 = vpop.f32.mrf.mxu0
  %v144 = vadd.f32 %v49, %v143
  %145 = vmatmul.f32.gmra.mxu0 %v82
  %v146 = vpop.f32.mrf.mxu0
  %v147 = vadd.f32 %v49, %v146
  %148 = vmatmul.f32.gmra.mxu0 %v85
  %v149 = vpop.f32.mrf.mxu0
  %v150 = vadd.f32 %v49, %v149
  %151 = vmatmul.f32.gmra.mxu0 %v88
  %v152 = vpop.f32.mrf.mxu0
  %v153 = vadd.f32 %v49, %v152
  %154 = vmatmul.f32.gmra.mxu0 %v91
  %v155 = vpop.f32.mrf.mxu0
  %v156 = vadd.f32 %v49, %v155
  %157 = vmatmul.f32.gmra.mxu0 %v94
  %v158 = vpop.f32.mrf.mxu0
  %v159 = vadd.f32 %v49, %v158
  %160 = vmatmul.f32.gmra.mxu0 %v97
  %v161 = vpop.f32.mrf.mxu0
  %v162 = vadd.f32 %v49, %v161
  %163 = vmatmul.f32.gmra.mxu0 %v100
  %v164 = vpop.f32.mrf.mxu0
  %v165 = vadd.f32 %v49, %v164
  %166 = vdwg.mxu0
  %167 = vmatpush.msra.mxu0 0.0
  %168 = vmatpush.msra.mxu0 0.0
  %169 = vmatpush.msra.mxu0 0.0
  %170 = vmatpush.msra.mxu0 0.0
  %171 = vmatpush.msra.mxu0 0.0
  %172 = vmatpush.msra.mxu0 0.0
  %173 = vmatpush.msra.mxu0 0.0
  %174 = vmatpush.msra.mxu0 0.0
  %175 = vmatpush.msra.mxu0 0.0
  %176 = vmatpush.msra.mxu0 0.0
  %177 = vmatpush.msra.mxu0 0.0
  %178 = vmatpush.msra.mxu0 0.0
  %179 = vmatpush.msra.mxu0 %v46
  %180 = vmatpush.msra.mxu0 %v44
  %181 = vmatpush.msra.mxu0 %v42
  %182 = vmatpush.msra.mxu0 %v40
  %183 = vmatmul.f32.gmra.mxu0 %v55
  %v184 = vpop.f32.mrf.mxu0
  %v185 = vadd.f32 %v50, %v184
  %186 = vmatmul.f32.gmra.mxu0 %v58
  %v187 = vpop.f32.mrf.mxu0
  %v188 = vadd.f32 %v50, %v187
  %189 = vmatmul.f32.gmra.mxu0 %v61
  %v190 = vpop.f32.mrf.mxu0
  %v191 = vadd.f32 %v50, %v190
  %192 = vmatmul.f32.gmra.mxu0 %v64
  %v193 = vpop.f32.mrf.mxu0
  %v194 = vadd.f32 %v50, %v193
  %195 = vmatmul.f32.gmra.mxu0 %v67
  %v196 = vpop.f32.mrf.mxu0
  %v197 = vadd.f32 %v50, %v196
  %198 = vmatmul.f32.gmra.mxu0 %v70
  %v199 = vpop.f32.mrf.mxu0
  %v200 = vadd.f32 %v50, %v199
  %201 = vmatmul.f32.gmra.mxu0 %v73
  %v202 = vpop.f32.mrf.mxu0
  %v203 = vadd.f32 %v50, %v202
  %204 = vmatmul.f32.gmra.mxu0 %v76
  %v205 = vpop.f32.mrf.mxu0
  %v206 = vadd.f32 %v50, %v205
  %207 = vmatmul.f32.gmra.mxu0 %v79
  %v208 = vpop.f32.mrf.mxu0
  %v209 = vadd.f32 %v50, %v208
  %210 = vmatmul.f32.gmra.mxu0 %v82
  %v211 = vpop.f32.mrf.mxu0
  %v212 = vadd.f32 %v50, %v211
  %213 = vmatmul.f32.gmra.mxu0 %v85
  %v214 = vpop.f32.mrf.mxu0
  %v215 = vadd.f32 %v50, %v214
  %216 = vmatmul.f32.gmra.mxu0 %v88
  %v217 = vpop.f32.mrf.mxu0
  %v218 = vadd.f32 %v50, %v217
  %219 = vmatmul.f32.gmra.mxu0 %v91
  %v220 = vpop.f32.mrf.mxu0
  %v221 = vadd.f32 %v50, %v220
  %222 = vmatmul.f32.gmra.mxu0 %v94
  %v223 = vpop.f32.mrf.mxu0
  %v224 = vadd.f32 %v50, %v223
  %225 = vmatmul.f32.gmra.mxu0 %v97
  %v226 = vpop.f32.mrf.mxu0
  %v227 = vadd.f32 %v50, %v226
  %228 = vmatmul.f32.gmra.mxu0 %v100
  %v229 = vpop.f32.mrf.mxu0
  %v230 = vadd.f32 %v50, %v229
  %231 = vdwg.mxu0
  %v232 = vld [vmem:[%s1] sm:$0xff]
  %v233 = vld [vmem:[%s1 + $0x8] sm:$0xff]
  %v234 = vld [vmem:[%s1 + $0x10] sm:$0xff]
  %v235 = vld [vmem:[%s1 + $0x18] sm:$0xff]
  %v236 = vld [vmem:[%s1 + $0x20] sm:$0xff]
  %v237 = vld [vmem:[%s1 + $0x28] sm:$0xff]
  %v238 = vld [vmem:[%s1 + $0x30] sm:$0xff]
  %v239 = vld [vmem:[%s1 + $0x38] sm:$0xff]
  %v240 = vld [vmem:[%s1 + $0x40] sm:$0xff]
  %v241 = vld [vmem:[%s1 + $0x48] sm:$0xff]
  %v242 = vld [vmem:[%s1 + $0x50] sm:$0xff]
  %v243 = vld [vmem:[%s1 + $0x58] sm:$0xff]
  %v244 = vld [vmem:[%s1 + $0x60] sm:$0xff]
  %v245 = vld [vmem:[%s1 + $0x68] sm:$0xff]
  %v246 = vld [vmem:[%s1 + $0x70] sm:$0xff]
  %v247 = vld [vmem:[%s1 + $0x78] sm:$0xff]
  %v248 = vld [vmem:[%s4] sm:$0xff]
  %v249 = vld [vmem:[%s4 + $0x8] sm:$0xff]
  %v250 = vld [vmem:[%s4 + $0x10] sm:$0xff]
  %v251 = vld [vmem:[%s4 + $0x18] sm:$0xff]
  %v252 = vld [vmem:[%s4 + $0x20] sm:$0xff]
  %v253 = vld [vmem:[%s4 + $0x28] sm:$0xff]
  %v254 = vld [vmem:[%s4 + $0x30] sm:$0xff]
  %v255 = vld [vmem:[%s4 + $0x38] sm:$0xff]
  %v256 = vld [vmem:[%s5] sm:$0x3]
  %v258 = vperm.slane %v256, 0
  %v259 = vperm.slane %v256, 1
  %v263 = vsel %vm53, %v232, 0
  %v266 = vsel %vm53, %v233, 0
  %v269 = vsel %vm53, %v234, 0
  %v272 = vsel %vm53, %v235, 0
  %v275 = vsel %vm53, %v236, 0
  %v278 = vsel %vm53, %v237, 0
  %v281 = vsel %vm53, %v238, 0
  %v284 = vsel %vm53, %v239, 0
  %v287 = vsel %vm53, %v240, 0
  %v290 = vsel %vm53, %v241, 0
  %v293 = vsel %vm53, %v242, 0
  %v296 = vsel %vm53, %v243, 0
  %v299 = vsel %vm53, %v244, 0
  %v302 = vsel %vm53, %v245, 0
  %v305 = vsel %vm53, %v246, 0
  %v308 = vsel %vm53, %v247, 0
  %310 = vmatpush.msra.mxu0 0.0
  %311 = vmatpush.msra.mxu0 0.0
  %312 = vmatpush.msra.mxu0 0.0
  %313 = vmatpush.msra.mxu0 0.0
  %314 = vmatpush.msra.mxu0 0.0
  %315 = vmatpush.msra.mxu0 0.0
  %316 = vmatpush.msra.mxu0 0.0
  %317 = vmatpush.msra.mxu0 0.0
  %318 = vmatpush.msra.mxu0 0.0
  %319 = vmatpush.msra.mxu0 0.0
  %320 = vmatpush.msra.mxu0 0.0
  %321 = vmatpush.msra.mxu0 0.0
  %322 = vmatpush.msra.mxu0 %v254
  %323 = vmatpush.msra.mxu0 %v252
  %324 = vmatpush.msra.mxu0 %v250
  %325 = vmatpush.msra.mxu0 %v248
  %326 = vmatmul.f32.gmra.mxu0 %v263
  %v327 = vpop.f32.mrf.mxu0
  %v328 = vadd.f32 %v258, %v327
  %329 = vmatmul.f32.gmra.mxu0 %v266
  %v330 = vpop.f32.mrf.mxu0
  %v331 = vadd.f32 %v258, %v330
  %332 = vmatmul.f32.gmra.mxu0 %v269
  %v333 = vpop.f32.mrf.mxu0
  %v334 = vadd.f32 %v258, %v333
  %335 = vmatmul.f32.gmra.mxu0 %v272
  %v336 = vpop.f32.mrf.mxu0
  %v337 = vadd.f32 %v258, %v336
  %338 = vmatmul.f32.gmra.mxu0 %v275
  %v339 = vpop.f32.mrf.mxu0
  %v340 = vadd.f32 %v258, %v339
  %341 = vmatmul.f32.gmra.mxu0 %v278
  %v342 = vpop.f32.mrf.mxu0
  %v343 = vadd.f32 %v258, %v342
  %344 = vmatmul.f32.gmra.mxu0 %v281
  %v345 = vpop.f32.mrf.mxu0
  %v346 = vadd.f32 %v258, %v345
  %347 = vmatmul.f32.gmra.mxu0 %v284
  %v348 = vpop.f32.mrf.mxu0
  %v349 = vadd.f32 %v258, %v348
  %350 = vmatmul.f32.gmra.mxu0 %v287
  %v351 = vpop.f32.mrf.mxu0
  %v352 = vadd.f32 %v258, %v351
  %353 = vmatmul.f32.gmra.mxu0 %v290
  %v354 = vpop.f32.mrf.mxu0
  %v355 = vadd.f32 %v258, %v354
  %356 = vmatmul.f32.gmra.mxu0 %v293
  %v357 = vpop.f32.mrf.mxu0
  %v358 = vadd.f32 %v258, %v357
  %359 = vmatmul.f32.gmra.mxu0 %v296
  %v360 = vpop.f32.mrf.mxu0
  %v361 = vadd.f32 %v258, %v360
  %362 = vmatmul.f32.gmra.mxu0 %v299
  %v363 = vpop.f32.mrf.mxu0
  %v364 = vadd.f32 %v258, %v363
  %365 = vmatmul.f32.gmra.mxu0 %v302
  %v366 = vpop.f32.mrf.mxu0
  %v367 = vadd.f32 %v258, %v366
  %368 = vmatmul.f32.gmra.mxu0 %v305
  %v369 = vpop.f32.mrf.mxu0
  %v370 = vadd.f32 %v258, %v369
  %371 = vmatmul.f32.gmra.mxu0 %v308
  %v372 = vpop.f32.mrf.mxu0
  %v373 = vadd.f32 %v258, %v372
  %374 = vdwg.mxu0
  %375 = vmatpush.msra.mxu0 0.0
  %376 = vmatpush.msra.mxu0 0.0
  %377 = vmatpush.msra.mxu0 0.0
  %378 = vmatpush.msra.mxu0 0.0
  %379 = vmatpush.msra.mxu0 0.0
  %380 = vmatpush.msra.mxu0 0.0
  %381 = vmatpush.msra.mxu0 0.0
  %382 = vmatpush.msra.mxu0 0.0
  %383 = vmatpush.msra.mxu0 0.0
  %384 = vmatpush.msra.mxu0 0.0
  %385 = vmatpush.msra.mxu0 0.0
  %386 = vmatpush.msra.mxu0 0.0
  %387 = vmatpush.msra.mxu0 %v255
  %388 = vmatpush.msra.mxu0 %v253
  %389 = vmatpush.msra.mxu0 %v251
  %390 = vmatpush.msra.mxu0 %v249
  %391 = vmatmul.f32.gmra.mxu0 %v263
  %v392 = vpop.f32.mrf.mxu0
  %v393 = vadd.f32 %v259, %v392
  %394 = vmatmul.f32.gmra.mxu0 %v266
  %v395 = vpop.f32.mrf.mxu0
  %v396 = vadd.f32 %v259, %v395
  %397 = vmatmul.f32.gmra.mxu0 %v269
  %v398 = vpop.f32.mrf.mxu0
  %v399 = vadd.f32 %v259, %v398
  %400 = vmatmul.f32.gmra.mxu0 %v272
  %v401 = vpop.f32.mrf.mxu0
  %v402 = vadd.f32 %v259, %v401
  %403 = vmatmul.f32.gmra.mxu0 %v275
  %v404 = vpop.f32.mrf.mxu0
  %v405 = vadd.f32 %v259, %v404
  %406 = vmatmul.f32.gmra.mxu0 %v278
  %v407 = vpop.f32.mrf.mxu0
  %v408 = vadd.f32 %v259, %v407
  %409 = vmatmul.f32.gmra.mxu0 %v281
  %v410 = vpop.f32.mrf.mxu0
  %v411 = vadd.f32 %v259, %v410
  %412 = vmatmul.f32.gmra.mxu0 %v284
  %v413 = vpop.f32.mrf.mxu0
  %v414 = vadd.f32 %v259, %v413
  %415 = vmatmul.f32.gmra.mxu0 %v287
  %v416 = vpop.f32.mrf.mxu0
  %v417 = vadd.f32 %v259, %v416
  %418 = vmatmul.f32.gmra.mxu0 %v290
  %v419 = vpop.f32.mrf.mxu0
  %v420 = vadd.f32 %v259, %v419
  %421 = vmatmul.f32.gmra.mxu0 %v293
  %v422 = vpop.f32.mrf.mxu0
  %v423 = vadd.f32 %v259, %v422
  %424 = vmatmul.f32.gmra.mxu0 %v296
  %v425 = vpop.f32.mrf.mxu0
  %v426 = vadd.f32 %v259, %v425
  %427 = vmatmul.f32.gmra.mxu0 %v299
  %v428 = vpop.f32.mrf.mxu0
  %v429 = vadd.f32 %v259, %v428
  %430 = vmatmul.f32.gmra.mxu0 %v302
  %v431 = vpop.f32.mrf.mxu0
  %v432 = vadd.f32 %v259, %v431
  %433 = vmatmul.f32.gmra.mxu0 %v305
  %v434 = vpop.f32.mrf.mxu0
  %v435 = vadd.f32 %v259, %v434
  %436 = vmatmul.f32.gmra.mxu0 %v308
  %v437 = vpop.f32.mrf.mxu0
  %v438 = vadd.f32 %v259, %v437
  %439 = vdwg.mxu0
  %v440 = vxor.u32 %v185, 2147483648
  %v441 = vxor.u32 %v188, 2147483648
  %v442 = vxor.u32 %v191, 2147483648
  %v443 = vxor.u32 %v194, 2147483648
  %v444 = vxor.u32 %v197, 2147483648
  %v445 = vxor.u32 %v200, 2147483648
  %v446 = vxor.u32 %v203, 2147483648
  %v447 = vxor.u32 %v206, 2147483648
  %v448 = vxor.u32 %v209, 2147483648
  %v449 = vxor.u32 %v212, 2147483648
  %v450 = vxor.u32 %v215, 2147483648
  %v451 = vxor.u32 %v218, 2147483648
  %v452 = vxor.u32 %v221, 2147483648
  %v453 = vxor.u32 %v224, 2147483648
  %v454 = vxor.u32 %v227, 2147483648
  %v455 = vxor.u32 %v230, 2147483648
  %v456 = vmul.f32 %v440, 1.442695
  %v457 = vpow.pop %v456
  %v458 = vmul.f32 %v441, 1.442695
  %v459 = vpow.pop %v458
  %v460 = vmul.f32 %v442, 1.442695
  %v461 = vpow.pop %v460
  %v462 = vmul.f32 %v443, 1.442695
  %v463 = vpow.pop %v462
  %v464 = vmul.f32 %v444, 1.442695
  %v465 = vpow.pop %v464
  %v466 = vmul.f32 %v445, 1.442695
  %v467 = vpow.pop %v466
  %v468 = vmul.f32 %v446, 1.442695
  %v469 = vpow.pop %v468
  %v470 = vmul.f32 %v447, 1.442695
  %v471 = vpow.pop %v470
  %v472 = vmul.f32 %v448, 1.442695
  %v473 = vpow.pop %v472
  %v474 = vmul.f32 %v449, 1.442695
  %v475 = vpow.pop %v474
  %v476 = vmul.f32 %v450, 1.442695
  %v477 = vpow.pop %v476
  %v478 = vmul.f32 %v451, 1.442695
  %v479 = vpow.pop %v478
  %v480 = vmul.f32 %v452, 1.442695
  %v481 = vpow.pop %v480
  %v482 = vmul.f32 %v453, 1.442695
  %v483 = vpow.pop %v482
  %v484 = vmul.f32 %v454, 1.442695
  %v485 = vpow.pop %v484
  %v486 = vmul.f32 %v455, 1.442695
  %v487 = vpow.pop %v486
  %v488 = vadd.f32 %v457, 1.0
  %v489 = vadd.f32 %v459, 1.0
  %v490 = vadd.f32 %v461, 1.0
  %v491 = vadd.f32 %v463, 1.0
  %v492 = vadd.f32 %v465, 1.0
  %v493 = vadd.f32 %v467, 1.0
  %v494 = vadd.f32 %v469, 1.0
  %v495 = vadd.f32 %v471, 1.0
  %v496 = vadd.f32 %v473, 1.0
  %v497 = vadd.f32 %v475, 1.0
  %v498 = vadd.f32 %v477, 1.0
  %v499 = vadd.f32 %v479, 1.0
  %v500 = vadd.f32 %v481, 1.0
  %v501 = vadd.f32 %v483, 1.0
  %v502 = vadd.f32 %v485, 1.0
  %v503 = vadd.f32 %v487, 1.0
  %v504 = vrcp.pop %v488
  %v505 = vmul.f32 %v488, %v504
  %v506 = vsub.f32 1.0, %v505
  %v507 = vmul.f32 %v504, %v506
  %v508 = vadd.f32 %v504, %v507
  %vm509 = vweird.f32 %v488
  %vm510 = vweird.f32 %v504
  %vm511 = vmor %vm509, %vm510
  %v512 = vsel %vm511, %v504, %v508
  %v513 = vand.u32 2147483647, %v488
  %vm514 = vcmp.eq.f32.partialorder %v513, 8.507059e+37
  %v515 = vand.u32 %v488, 2147483648
  %v516 = vor.u32 1.1754944e-38, %v515
  %v517 = vsel %vm514, %v516, %v512
  %v518 = vmul.f32 1.0, %v517
  %v519 = vrcp.pop %v489
  %v520 = vmul.f32 %v489, %v519
  %v521 = vsub.f32 1.0, %v520
  %v522 = vmul.f32 %v519, %v521
  %v523 = vadd.f32 %v519, %v522
  %vm524 = vweird.f32 %v489
  %vm525 = vweird.f32 %v519
  %vm526 = vmor %vm524, %vm525
  %v527 = vsel %vm526, %v519, %v523
  %v528 = vand.u32 2147483647, %v489
  %vm529 = vcmp.eq.f32.partialorder %v528, 8.507059e+37
  %v530 = vand.u32 %v489, 2147483648
  %v531 = vor.u32 1.1754944e-38, %v530
  %v532 = vsel %vm529, %v531, %v527
  %v533 = vmul.f32 1.0, %v532
  %v534 = vrcp.pop %v490
  %v535 = vmul.f32 %v490, %v534
  %v536 = vsub.f32 1.0, %v535
  %v537 = vmul.f32 %v534, %v536
  %v538 = vadd.f32 %v534, %v537
  %vm539 = vweird.f32 %v490
  %vm540 = vweird.f32 %v534
  %vm541 = vmor %vm539, %vm540
  %v542 = vsel %vm541, %v534, %v538
  %v543 = vand.u32 2147483647, %v490
  %vm544 = vcmp.eq.f32.partialorder %v543, 8.507059e+37
  %v545 = vand.u32 %v490, 2147483648
  %v546 = vor.u32 1.1754944e-38, %v545
  %v547 = vsel %vm544, %v546, %v542
  %v548 = vmul.f32 1.0, %v547
  %v549 = vrcp.pop %v491
  %v550 = vmul.f32 %v491, %v549
  %v551 = vsub.f32 1.0, %v550
  %v552 = vmul.f32 %v549, %v551
  %v553 = vadd.f32 %v549, %v552
  %vm554 = vweird.f32 %v491
  %vm555 = vweird.f32 %v549
  %vm556 = vmor %vm554, %vm555
  %v557 = vsel %vm556, %v549, %v553
  %v558 = vand.u32 2147483647, %v491
  %vm559 = vcmp.eq.f32.partialorder %v558, 8.507059e+37
  %v560 = vand.u32 %v491, 2147483648
  %v561 = vor.u32 1.1754944e-38, %v560
  %v562 = vsel %vm559, %v561, %v557
  %v563 = vmul.f32 1.0, %v562
  %v564 = vrcp.pop %v492
  %v565 = vmul.f32 %v492, %v564
  %v566 = vsub.f32 1.0, %v565
  %v567 = vmul.f32 %v564, %v566
  %v568 = vadd.f32 %v564, %v567
  %vm569 = vweird.f32 %v492
  %vm570 = vweird.f32 %v564
  %vm571 = vmor %vm569, %vm570
  %v572 = vsel %vm571, %v564, %v568
  %v573 = vand.u32 2147483647, %v492
  %vm574 = vcmp.eq.f32.partialorder %v573, 8.507059e+37
  %v575 = vand.u32 %v492, 2147483648
  %v576 = vor.u32 1.1754944e-38, %v575
  %v577 = vsel %vm574, %v576, %v572
  %v578 = vmul.f32 1.0, %v577
  %v579 = vrcp.pop %v493
  %v580 = vmul.f32 %v493, %v579
  %v581 = vsub.f32 1.0, %v580
  %v582 = vmul.f32 %v579, %v581
  %v583 = vadd.f32 %v579, %v582
  %vm584 = vweird.f32 %v493
  %vm585 = vweird.f32 %v579
  %vm586 = vmor %vm584, %vm585
  %v587 = vsel %vm586, %v579, %v583
  %v588 = vand.u32 2147483647, %v493
  %vm589 = vcmp.eq.f32.partialorder %v588, 8.507059e+37
  %v590 = vand.u32 %v493, 2147483648
  %v591 = vor.u32 1.1754944e-38, %v590
  %v592 = vsel %vm589, %v591, %v587
  %v593 = vmul.f32 1.0, %v592
  %v594 = vrcp.pop %v494
  %v595 = vmul.f32 %v494, %v594
  %v596 = vsub.f32 1.0, %v595
  %v597 = vmul.f32 %v594, %v596
  %v598 = vadd.f32 %v594, %v597
  %vm599 = vweird.f32 %v494
  %vm600 = vweird.f32 %v594
  %vm601 = vmor %vm599, %vm600
  %v602 = vsel %vm601, %v594, %v598
  %v603 = vand.u32 2147483647, %v494
  %vm604 = vcmp.eq.f32.partialorder %v603, 8.507059e+37
  %v605 = vand.u32 %v494, 2147483648
  %v606 = vor.u32 1.1754944e-38, %v605
  %v607 = vsel %vm604, %v606, %v602
  %v608 = vmul.f32 1.0, %v607
  %v609 = vrcp.pop %v495
  %v610 = vmul.f32 %v495, %v609
  %v611 = vsub.f32 1.0, %v610
  %v612 = vmul.f32 %v609, %v611
  %v613 = vadd.f32 %v609, %v612
  %vm614 = vweird.f32 %v495
  %vm615 = vweird.f32 %v609
  %vm616 = vmor %vm614, %vm615
  %v617 = vsel %vm616, %v609, %v613
  %v618 = vand.u32 2147483647, %v495
  %vm619 = vcmp.eq.f32.partialorder %v618, 8.507059e+37
  %v620 = vand.u32 %v495, 2147483648
  %v621 = vor.u32 1.1754944e-38, %v620
  %v622 = vsel %vm619, %v621, %v617
  %v623 = vmul.f32 1.0, %v622
  %v624 = vrcp.pop %v496
  %v625 = vmul.f32 %v496, %v624
  %v626 = vsub.f32 1.0, %v625
  %v627 = vmul.f32 %v624, %v626
  %v628 = vadd.f32 %v624, %v627
  %vm629 = vweird.f32 %v496
  %vm630 = vweird.f32 %v624
  %vm631 = vmor %vm629, %vm630
  %v632 = vsel %vm631, %v624, %v628
  %v633 = vand.u32 2147483647, %v496
  %vm634 = vcmp.eq.f32.partialorder %v633, 8.507059e+37
  %v635 = vand.u32 %v496, 2147483648
  %v636 = vor.u32 1.1754944e-38, %v635
  %v637 = vsel %vm634, %v636, %v632
  %v638 = vmul.f32 1.0, %v637
  %v639 = vrcp.pop %v497
  %v640 = vmul.f32 %v497, %v639
  %v641 = vsub.f32 1.0, %v640
  %v642 = vmul.f32 %v639, %v641
  %v643 = vadd.f32 %v639, %v642
  %vm644 = vweird.f32 %v497
  %vm645 = vweird.f32 %v639
  %vm646 = vmor %vm644, %vm645
  %v647 = vsel %vm646, %v639, %v643
  %v648 = vand.u32 2147483647, %v497
  %vm649 = vcmp.eq.f32.partialorder %v648, 8.507059e+37
  %v650 = vand.u32 %v497, 2147483648
  %v651 = vor.u32 1.1754944e-38, %v650
  %v652 = vsel %vm649, %v651, %v647
  %v653 = vmul.f32 1.0, %v652
  %v654 = vrcp.pop %v498
  %v655 = vmul.f32 %v498, %v654
  %v656 = vsub.f32 1.0, %v655
  %v657 = vmul.f32 %v654, %v656
  %v658 = vadd.f32 %v654, %v657
  %vm659 = vweird.f32 %v498
  %vm660 = vweird.f32 %v654
  %vm661 = vmor %vm659, %vm660
  %v662 = vsel %vm661, %v654, %v658
  %v663 = vand.u32 2147483647, %v498
  %vm664 = vcmp.eq.f32.partialorder %v663, 8.507059e+37
  %v665 = vand.u32 %v498, 2147483648
  %v666 = vor.u32 1.1754944e-38, %v665
  %v667 = vsel %vm664, %v666, %v662
  %v668 = vmul.f32 1.0, %v667
  %v669 = vrcp.pop %v499
  %v670 = vmul.f32 %v499, %v669
  %v671 = vsub.f32 1.0, %v670
  %v672 = vmul.f32 %v669, %v671
  %v673 = vadd.f32 %v669, %v672
  %vm674 = vweird.f32 %v499
  %vm675 = vweird.f32 %v669
  %vm676 = vmor %vm674, %vm675
  %v677 = vsel %vm676, %v669, %v673
  %v678 = vand.u32 2147483647, %v499
  %vm679 = vcmp.eq.f32.partialorder %v678, 8.507059e+37
  %v680 = vand.u32 %v499, 2147483648
  %v681 = vor.u32 1.1754944e-38, %v680
  %v682 = vsel %vm679, %v681, %v677
  %v683 = vmul.f32 1.0, %v682
  %v684 = vrcp.pop %v500
  %v685 = vmul.f32 %v500, %v684
  %v686 = vsub.f32 1.0, %v685
  %v687 = vmul.f32 %v684, %v686
  %v688 = vadd.f32 %v684, %v687
  %vm689 = vweird.f32 %v500
  %vm690 = vweird.f32 %v684
  %vm691 = vmor %vm689, %vm690
  %v692 = vsel %vm691, %v684, %v688
  %v693 = vand.u32 2147483647, %v500
  %vm694 = vcmp.eq.f32.partialorder %v693, 8.507059e+37
  %v695 = vand.u32 %v500, 2147483648
  %v696 = vor.u32 1.1754944e-38, %v695
  %v697 = vsel %vm694, %v696, %v692
  %v698 = vmul.f32 1.0, %v697
  %v699 = vrcp.pop %v501
  %v700 = vmul.f32 %v501, %v699
  %v701 = vsub.f32 1.0, %v700
  %v702 = vmul.f32 %v699, %v701
  %v703 = vadd.f32 %v699, %v702
  %vm704 = vweird.f32 %v501
  %vm705 = vweird.f32 %v699
  %vm706 = vmor %vm704, %vm705
  %v707 = vsel %vm706, %v699, %v703
  %v708 = vand.u32 2147483647, %v501
  %vm709 = vcmp.eq.f32.partialorder %v708, 8.507059e+37
  %v710 = vand.u32 %v501, 2147483648
  %v711 = vor.u32 1.1754944e-38, %v710
  %v712 = vsel %vm709, %v711, %v707
  %v713 = vmul.f32 1.0, %v712
  %v714 = vrcp.pop %v502
  %v715 = vmul.f32 %v502, %v714
  %v716 = vsub.f32 1.0, %v715
  %v717 = vmul.f32 %v714, %v716
  %v718 = vadd.f32 %v714, %v717
  %vm719 = vweird.f32 %v502
  %vm720 = vweird.f32 %v714
  %vm721 = vmor %vm719, %vm720
  %v722 = vsel %vm721, %v714, %v718
  %v723 = vand.u32 2147483647, %v502
  %vm724 = vcmp.eq.f32.partialorder %v723, 8.507059e+37
  %v725 = vand.u32 %v502, 2147483648
  %v726 = vor.u32 1.1754944e-38, %v725
  %v727 = vsel %vm724, %v726, %v722
  %v728 = vmul.f32 1.0, %v727
  %v729 = vrcp.pop %v503
  %v730 = vmul.f32 %v503, %v729
  %v731 = vsub.f32 1.0, %v730
  %v732 = vmul.f32 %v729, %v731
  %v733 = vadd.f32 %v729, %v732
  %vm734 = vweird.f32 %v503
  %vm735 = vweird.f32 %v729
  %vm736 = vmor %vm734, %vm735
  %v737 = vsel %vm736, %v729, %v733
  %v738 = vand.u32 2147483647, %v503
  %vm739 = vcmp.eq.f32.partialorder %v738, 8.507059e+37
  %v740 = vand.u32 %v503, 2147483648
  %v741 = vor.u32 1.1754944e-38, %v740
  %v742 = vsel %vm739, %v741, %v737
  %v743 = vmul.f32 1.0, %v742
  %v744 = vmul.f32 %v120, %v518
  %v745 = vmul.f32 %v123, %v533
  %v746 = vmul.f32 %v126, %v548
  %v747 = vmul.f32 %v129, %v563
  %v748 = vmul.f32 %v132, %v578
  %v749 = vmul.f32 %v135, %v593
  %v750 = vmul.f32 %v138, %v608
  %v751 = vmul.f32 %v141, %v623
  %v752 = vmul.f32 %v144, %v638
  %v753 = vmul.f32 %v147, %v653
  %v754 = vmul.f32 %v150, %v668
  %v755 = vmul.f32 %v153, %v683
  %v756 = vmul.f32 %v156, %v698
  %v757 = vmul.f32 %v159, %v713
  %v758 = vmul.f32 %v162, %v728
  %v759 = vmul.f32 %v165, %v743
  %v760 = vxor.u32 %v393, 2147483648
  %v761 = vxor.u32 %v396, 2147483648
  %v762 = vxor.u32 %v399, 2147483648
  %v763 = vxor.u32 %v402, 2147483648
  %v764 = vxor.u32 %v405, 2147483648
  %v765 = vxor.u32 %v408, 2147483648
  %v766 = vxor.u32 %v411, 2147483648
  %v767 = vxor.u32 %v414, 2147483648
  %v768 = vxor.u32 %v417, 2147483648
  %v769 = vxor.u32 %v420, 2147483648
  %v770 = vxor.u32 %v423, 2147483648
  %v771 = vxor.u32 %v426, 2147483648
  %v772 = vxor.u32 %v429, 2147483648
  %v773 = vxor.u32 %v432, 2147483648
  %v774 = vxor.u32 %v435, 2147483648
  %v775 = vxor.u32 %v438, 2147483648
  %v776 = vmul.f32 %v760, 1.442695
  %v777 = vpow.pop %v776
  %v778 = vmul.f32 %v761, 1.442695
  %v779 = vpow.pop %v778
  %v780 = vmul.f32 %v762, 1.442695
  %v781 = vpow.pop %v780
  %v782 = vmul.f32 %v763, 1.442695
  %v783 = vpow.pop %v782
  %v784 = vmul.f32 %v764, 1.442695
  %v785 = vpow.pop %v784
  %v786 = vmul.f32 %v765, 1.442695
  %v787 = vpow.pop %v786
  %v788 = vmul.f32 %v766, 1.442695
  %v789 = vpow.pop %v788
  %v790 = vmul.f32 %v767, 1.442695
  %v791 = vpow.pop %v790
  %v792 = vmul.f32 %v768, 1.442695
  %v793 = vpow.pop %v792
  %v794 = vmul.f32 %v769, 1.442695
  %v795 = vpow.pop %v794
  %v796 = vmul.f32 %v770, 1.442695
  %v797 = vpow.pop %v796
  %v798 = vmul.f32 %v771, 1.442695
  %v799 = vpow.pop %v798
  %v800 = vmul.f32 %v772, 1.442695
  %v801 = vpow.pop %v800
  %v802 = vmul.f32 %v773, 1.442695
  %v803 = vpow.pop %v802
  %v804 = vmul.f32 %v774, 1.442695
  %v805 = vpow.pop %v804
  %v806 = vmul.f32 %v775, 1.442695
  %v807 = vpow.pop %v806
  %v808 = vadd.f32 %v777, 1.0
  %v809 = vadd.f32 %v779, 1.0
  %v810 = vadd.f32 %v781, 1.0
  %v811 = vadd.f32 %v783, 1.0
  %v812 = vadd.f32 %v785, 1.0
  %v813 = vadd.f32 %v787, 1.0
  %v814 = vadd.f32 %v789, 1.0
  %v815 = vadd.f32 %v791, 1.0
  %v816 = vadd.f32 %v793, 1.0
  %v817 = vadd.f32 %v795, 1.0
  %v818 = vadd.f32 %v797, 1.0
  %v819 = vadd.f32 %v799, 1.0
  %v820 = vadd.f32 %v801, 1.0
  %v821 = vadd.f32 %v803, 1.0
  %v822 = vadd.f32 %v805, 1.0
  %v823 = vadd.f32 %v807, 1.0
  %v824 = vrcp.pop %v808
  %v825 = vmul.f32 %v808, %v824
  %v826 = vsub.f32 1.0, %v825
  %v827 = vmul.f32 %v824, %v826
  %v828 = vadd.f32 %v824, %v827
  %vm829 = vweird.f32 %v808
  %vm830 = vweird.f32 %v824
  %vm831 = vmor %vm829, %vm830
  %v832 = vsel %vm831, %v824, %v828
  %v833 = vand.u32 2147483647, %v808
  %vm834 = vcmp.eq.f32.partialorder %v833, 8.507059e+37
  %v835 = vand.u32 %v808, 2147483648
  %v836 = vor.u32 1.1754944e-38, %v835
  %v837 = vsel %vm834, %v836, %v832
  %v838 = vmul.f32 1.0, %v837
  %v839 = vrcp.pop %v809
  %v840 = vmul.f32 %v809, %v839
  %v841 = vsub.f32 1.0, %v840
  %v842 = vmul.f32 %v839, %v841
  %v843 = vadd.f32 %v839, %v842
  %vm844 = vweird.f32 %v809
  %vm845 = vweird.f32 %v839
  %vm846 = vmor %vm844, %vm845
  %v847 = vsel %vm846, %v839, %v843
  %v848 = vand.u32 2147483647, %v809
  %vm849 = vcmp.eq.f32.partialorder %v848, 8.507059e+37
  %v850 = vand.u32 %v809, 2147483648
  %v851 = vor.u32 1.1754944e-38, %v850
  %v852 = vsel %vm849, %v851, %v847
  %v853 = vmul.f32 1.0, %v852
  %v854 = vrcp.pop %v810
  %v855 = vmul.f32 %v810, %v854
  %v856 = vsub.f32 1.0, %v855
  %v857 = vmul.f32 %v854, %v856
  %v858 = vadd.f32 %v854, %v857
  %vm859 = vweird.f32 %v810
  %vm860 = vweird.f32 %v854
  %vm861 = vmor %vm859, %vm860
  %v862 = vsel %vm861, %v854, %v858
  %v863 = vand.u32 2147483647, %v810
  %vm864 = vcmp.eq.f32.partialorder %v863, 8.507059e+37
  %v865 = vand.u32 %v810, 2147483648
  %v866 = vor.u32 1.1754944e-38, %v865
  %v867 = vsel %vm864, %v866, %v862
  %v868 = vmul.f32 1.0, %v867
  %v869 = vrcp.pop %v811
  %v870 = vmul.f32 %v811, %v869
  %v871 = vsub.f32 1.0, %v870
  %v872 = vmul.f32 %v869, %v871
  %v873 = vadd.f32 %v869, %v872
  %vm874 = vweird.f32 %v811
  %vm875 = vweird.f32 %v869
  %vm876 = vmor %vm874, %vm875
  %v877 = vsel %vm876, %v869, %v873
  %v878 = vand.u32 2147483647, %v811
  %vm879 = vcmp.eq.f32.partialorder %v878, 8.507059e+37
  %v880 = vand.u32 %v811, 2147483648
  %v881 = vor.u32 1.1754944e-38, %v880
  %v882 = vsel %vm879, %v881, %v877
  %v883 = vmul.f32 1.0, %v882
  %v884 = vrcp.pop %v812
  %v885 = vmul.f32 %v812, %v884
  %v886 = vsub.f32 1.0, %v885
  %v887 = vmul.f32 %v884, %v886
  %v888 = vadd.f32 %v884, %v887
  %vm889 = vweird.f32 %v812
  %vm890 = vweird.f32 %v884
  %vm891 = vmor %vm889, %vm890
  %v892 = vsel %vm891, %v884, %v888
  %v893 = vand.u32 2147483647, %v812
  %vm894 = vcmp.eq.f32.partialorder %v893, 8.507059e+37
  %v895 = vand.u32 %v812, 2147483648
  %v896 = vor.u32 1.1754944e-38, %v895
  %v897 = vsel %vm894, %v896, %v892
  %v898 = vmul.f32 1.0, %v897
  %v899 = vrcp.pop %v813
  %v900 = vmul.f32 %v813, %v899
  %v901 = vsub.f32 1.0, %v900
  %v902 = vmul.f32 %v899, %v901
  %v903 = vadd.f32 %v899, %v902
  %vm904 = vweird.f32 %v813
  %vm905 = vweird.f32 %v899
  %vm906 = vmor %vm904, %vm905
  %v907 = vsel %vm906, %v899, %v903
  %v908 = vand.u32 2147483647, %v813
  %vm909 = vcmp.eq.f32.partialorder %v908, 8.507059e+37
  %v910 = vand.u32 %v813, 2147483648
  %v911 = vor.u32 1.1754944e-38, %v910
  %v912 = vsel %vm909, %v911, %v907
  %v913 = vmul.f32 1.0, %v912
  %v914 = vrcp.pop %v814
  %v915 = vmul.f32 %v814, %v914
  %v916 = vsub.f32 1.0, %v915
  %v917 = vmul.f32 %v914, %v916
  %v918 = vadd.f32 %v914, %v917
  %vm919 = vweird.f32 %v814
  %vm920 = vweird.f32 %v914
  %vm921 = vmor %vm919, %vm920
  %v922 = vsel %vm921, %v914, %v918
  %v923 = vand.u32 2147483647, %v814
  %vm924 = vcmp.eq.f32.partialorder %v923, 8.507059e+37
  %v925 = vand.u32 %v814, 2147483648
  %v926 = vor.u32 1.1754944e-38, %v925
  %v927 = vsel %vm924, %v926, %v922
  %v928 = vmul.f32 1.0, %v927
  %v929 = vrcp.pop %v815
  %v930 = vmul.f32 %v815, %v929
  %v931 = vsub.f32 1.0, %v930
  %v932 = vmul.f32 %v929, %v931
  %v933 = vadd.f32 %v929, %v932
  %vm934 = vweird.f32 %v815
  %vm935 = vweird.f32 %v929
  %vm936 = vmor %vm934, %vm935
  %v937 = vsel %vm936, %v929, %v933
  %v938 = vand.u32 2147483647, %v815
  %vm939 = vcmp.eq.f32.partialorder %v938, 8.507059e+37
  %v940 = vand.u32 %v815, 2147483648
  %v941 = vor.u32 1.1754944e-38, %v940
  %v942 = vsel %vm939, %v941, %v937
  %v943 = vmul.f32 1.0, %v942
  %v944 = vrcp.pop %v816
  %v945 = vmul.f32 %v816, %v944
  %v946 = vsub.f32 1.0, %v945
  %v947 = vmul.f32 %v944, %v946
  %v948 = vadd.f32 %v944, %v947
  %vm949 = vweird.f32 %v816
  %vm950 = vweird.f32 %v944
  %vm951 = vmor %vm949, %vm950
  %v952 = vsel %vm951, %v944, %v948
  %v953 = vand.u32 2147483647, %v816
  %vm954 = vcmp.eq.f32.partialorder %v953, 8.507059e+37
  %v955 = vand.u32 %v816, 2147483648
  %v956 = vor.u32 1.1754944e-38, %v955
  %v957 = vsel %vm954, %v956, %v952
  %v958 = vmul.f32 1.0, %v957
  %v959 = vrcp.pop %v817
  %v960 = vmul.f32 %v817, %v959
  %v961 = vsub.f32 1.0, %v960
  %v962 = vmul.f32 %v959, %v961
  %v963 = vadd.f32 %v959, %v962
  %vm964 = vweird.f32 %v817
  %vm965 = vweird.f32 %v959
  %vm966 = vmor %vm964, %vm965
  %v967 = vsel %vm966, %v959, %v963
  %v968 = vand.u32 2147483647, %v817
  %vm969 = vcmp.eq.f32.partialorder %v968, 8.507059e+37
  %v970 = vand.u32 %v817, 2147483648
  %v971 = vor.u32 1.1754944e-38, %v970
  %v972 = vsel %vm969, %v971, %v967
  %v973 = vmul.f32 1.0, %v972
  %v974 = vrcp.pop %v818
  %v975 = vmul.f32 %v818, %v974
  %v976 = vsub.f32 1.0, %v975
  %v977 = vmul.f32 %v974, %v976
  %v978 = vadd.f32 %v974, %v977
  %vm979 = vweird.f32 %v818
  %vm980 = vweird.f32 %v974
  %vm981 = vmor %vm979, %vm980
  %v982 = vsel %vm981, %v974, %v978
  %v983 = vand.u32 2147483647, %v818
  %vm984 = vcmp.eq.f32.partialorder %v983, 8.507059e+37
  %v985 = vand.u32 %v818, 2147483648
  %v986 = vor.u32 1.1754944e-38, %v985
  %v987 = vsel %vm984, %v986, %v982
  %v988 = vmul.f32 1.0, %v987
  %v989 = vrcp.pop %v819
  %v990 = vmul.f32 %v819, %v989
  %v991 = vsub.f32 1.0, %v990
  %v992 = vmul.f32 %v989, %v991
  %v993 = vadd.f32 %v989, %v992
  %vm994 = vweird.f32 %v819
  %vm995 = vweird.f32 %v989
  %vm996 = vmor %vm994, %vm995
  %v997 = vsel %vm996, %v989, %v993
  %v998 = vand.u32 2147483647, %v819
  %vm999 = vcmp.eq.f32.partialorder %v998, 8.507059e+37
  %v1000 = vand.u32 %v819, 2147483648
  %v1001 = vor.u32 1.1754944e-38, %v1000
  %v1002 = vsel %vm999, %v1001, %v997
  %v1003 = vmul.f32 1.0, %v1002
  %v1004 = vrcp.pop %v820
  %v1005 = vmul.f32 %v820, %v1004
  %v1006 = vsub.f32 1.0, %v1005
  %v1007 = vmul.f32 %v1004, %v1006
  %v1008 = vadd.f32 %v1004, %v1007
  %vm1009 = vweird.f32 %v820
  %vm1010 = vweird.f32 %v1004
  %vm1011 = vmor %vm1009, %vm1010
  %v1012 = vsel %vm1011, %v1004, %v1008
  %v1013 = vand.u32 2147483647, %v820
  %vm1014 = vcmp.eq.f32.partialorder %v1013, 8.507059e+37
  %v1015 = vand.u32 %v820, 2147483648
  %v1016 = vor.u32 1.1754944e-38, %v1015
  %v1017 = vsel %vm1014, %v1016, %v1012
  %v1018 = vmul.f32 1.0, %v1017
  %v1019 = vrcp.pop %v821
  %v1020 = vmul.f32 %v821, %v1019
  %v1021 = vsub.f32 1.0, %v1020
  %v1022 = vmul.f32 %v1019, %v1021
  %v1023 = vadd.f32 %v1019, %v1022
  %vm1024 = vweird.f32 %v821
  %vm1025 = vweird.f32 %v1019
  %vm1026 = vmor %vm1024, %vm1025
  %v1027 = vsel %vm1026, %v1019, %v1023
  %v1028 = vand.u32 2147483647, %v821
  %vm1029 = vcmp.eq.f32.partialorder %v1028, 8.507059e+37
  %v1030 = vand.u32 %v821, 2147483648
  %v1031 = vor.u32 1.1754944e-38, %v1030
  %v1032 = vsel %vm1029, %v1031, %v1027
  %v1033 = vmul.f32 1.0, %v1032
  %v1034 = vrcp.pop %v822
  %v1035 = vmul.f32 %v822, %v1034
  %v1036 = vsub.f32 1.0, %v1035
  %v1037 = vmul.f32 %v1034, %v1036
  %v1038 = vadd.f32 %v1034, %v1037
  %vm1039 = vweird.f32 %v822
  %vm1040 = vweird.f32 %v1034
  %vm1041 = vmor %vm1039, %vm1040
  %v1042 = vsel %vm1041, %v1034, %v1038
  %v1043 = vand.u32 2147483647, %v822
  %vm1044 = vcmp.eq.f32.partialorder %v1043, 8.507059e+37
  %v1045 = vand.u32 %v822, 2147483648
  %v1046 = vor.u32 1.1754944e-38, %v1045
  %v1047 = vsel %vm1044, %v1046, %v1042
  %v1048 = vmul.f32 1.0, %v1047
  %v1049 = vrcp.pop %v823
  %v1050 = vmul.f32 %v823, %v1049
  %v1051 = vsub.f32 1.0, %v1050
  %v1052 = vmul.f32 %v1049, %v1051
  %v1053 = vadd.f32 %v1049, %v1052
  %vm1054 = vweird.f32 %v823
  %vm1055 = vweird.f32 %v1049
  %vm1056 = vmor %vm1054, %vm1055
  %v1057 = vsel %vm1056, %v1049, %v1053
  %v1058 = vand.u32 2147483647, %v823
  %vm1059 = vcmp.eq.f32.partialorder %v1058, 8.507059e+37
  %v1060 = vand.u32 %v823, 2147483648
  %v1061 = vor.u32 1.1754944e-38, %v1060
  %v1062 = vsel %vm1059, %v1061, %v1057
  %v1063 = vmul.f32 1.0, %v1062
  %v1064 = vmul.f32 %v328, %v838
  %v1065 = vmul.f32 %v331, %v853
  %v1066 = vmul.f32 %v334, %v868
  %v1067 = vmul.f32 %v337, %v883
  %v1068 = vmul.f32 %v340, %v898
  %v1069 = vmul.f32 %v343, %v913
  %v1070 = vmul.f32 %v346, %v928
  %v1071 = vmul.f32 %v349, %v943
  %v1072 = vmul.f32 %v352, %v958
  %v1073 = vmul.f32 %v355, %v973
  %v1074 = vmul.f32 %v358, %v988
  %v1075 = vmul.f32 %v361, %v1003
  %v1076 = vmul.f32 %v364, %v1018
  %v1077 = vmul.f32 %v367, %v1033
  %v1078 = vmul.f32 %v370, %v1048
  %v1079 = vmul.f32 %v373, %v1063
  %v1080 = vadd.f32 %v744, %v1064
  %v1081 = vadd.f32 %v745, %v1065
  %v1082 = vadd.f32 %v746, %v1066
  %v1083 = vadd.f32 %v747, %v1067
  %v1084 = vadd.f32 %v748, %v1068
  %v1085 = vadd.f32 %v749, %v1069
  %v1086 = vadd.f32 %v750, %v1070
  %v1087 = vadd.f32 %v751, %v1071
  %v1088 = vadd.f32 %v752, %v1072
  %v1089 = vadd.f32 %v753, %v1073
  %v1090 = vadd.f32 %v754, %v1074
  %v1091 = vadd.f32 %v755, %v1075
  %v1092 = vadd.f32 %v756, %v1076
  %v1093 = vadd.f32 %v757, %v1077
  %v1094 = vadd.f32 %v758, %v1078
  %v1095 = vadd.f32 %v759, %v1079
  %1096 = vst.msk [vmem:[%s6] sm:$0xff] %vm53, %v1080
  %1097 = vst.msk [vmem:[%s6 + $0x8] sm:$0xff] %vm53, %v1081
  %1098 = vst.msk [vmem:[%s6 + $0x10] sm:$0xff] %vm53, %v1082
  %1099 = vst.msk [vmem:[%s6 + $0x18] sm:$0xff] %vm53, %v1083
  %1100 = vst.msk [vmem:[%s6 + $0x20] sm:$0xff] %vm53, %v1084
  %1101 = vst.msk [vmem:[%s6 + $0x28] sm:$0xff] %vm53, %v1085
  %1102 = vst.msk [vmem:[%s6 + $0x30] sm:$0xff] %vm53, %v1086
  %1103 = vst.msk [vmem:[%s6 + $0x38] sm:$0xff] %vm53, %v1087
  %1104 = vst.msk [vmem:[%s6 + $0x40] sm:$0xff] %vm53, %v1088
  %1105 = vst.msk [vmem:[%s6 + $0x48] sm:$0xff] %vm53, %v1089
  %1106 = vst.msk [vmem:[%s6 + $0x50] sm:$0xff] %vm53, %v1090
  %1107 = vst.msk [vmem:[%s6 + $0x58] sm:$0xff] %vm53, %v1091
  %1108 = vst.msk [vmem:[%s6 + $0x60] sm:$0xff] %vm53, %v1092
  %1109 = vst.msk [vmem:[%s6 + $0x68] sm:$0xff] %vm53, %v1093
  %1110 = vst.msk [vmem:[%s6 + $0x70] sm:$0xff] %vm53, %v1094
  %1111 = vst.msk [vmem:[%s6 + $0x78] sm:$0xff] %vm53, %v1095
  // Predicated region
  $region26: #{tpu_custom_call.1} parent=0 // pred_check
    _
  $region27: #{tpu_custom_call.1} parent=0 // pred_check_branch
    %1113 = sbr.rel (0) target = $region29
  $region28: #{tpu_custom_call.1} parent=0 // pred_region
    _
  $region29: #{tpu_custom_call.1} parent=0 // pred_fallthru
    _
  // Predicated region
  $region30: #{tpu_custom_call.1} parent=0 // pred_check
    _
  $region31: #{tpu_custom_call.1} parent=0 // pred_check_branch
    %1115 = sbr.rel (0) target = $region33
  $region32: #{tpu_custom_call.1} parent=0 // pred_region
    _
  $region33: #{tpu_custom_call.1} parent=0 // pred_fallthru
    _

</llo_original>
